<compile_context>
chip_gen: v7x
topology: tpu7x:2x2x1
jax: 0.10.0
libtpu: 0.0.40
codegen_flags: <defaults>
</compile_context>

<pallas_src>
import numpy as np
import jax
import jax.numpy as jnp
from jax.experimental import pallas as pl
from jax.experimental.pallas import tpu as pltpu

_SQRT2      = np.float32(np.sqrt(2.0))
_TWO_SQRT2  = np.float32(2.0 * np.sqrt(2.0))
_INV_2PI    = np.float32(1.0 / (2.0 * np.pi))
# Cody-Waite split of 2*pi.  _TWO_PI_HI has only 8 significant bits, so
# k * _TWO_PI_HI is exact in f32 for |k| < 2**15 (|arg| up to ~1e5 rad, far
# beyond EDM2 usage); _TWO_PI_MID carries the rest to f32 precision.
_TWO_PI_HI  = np.float32(6.28125)
_TWO_PI_MID = np.float32(2.0 * np.pi - 6.28125)
# Taylor coefficients of sin(z) for |z| <= pi/2 (max error ~6e-8).
_S3  = np.float32(-1.0 / 6.0)
_S5  = np.float32( 1.0 / 120.0)
_S7  = np.float32(-1.0 / 5040.0)
_S9  = np.float32( 1.0 / 362880.0)
_S11 = np.float32(-1.0 / 39916800.0)


def _mp_fourier_kernel(x_ref, fp_ref, out_ref):
    # x_ref:   (TN, 1)  x.dtype
    # fp_ref:  (2, C)   float32   row 0 = freqs, row 1 = phases (VMEM resident)
    # out_ref: (TN, C)  x.dtype
    x = x_ref[...].astype(jnp.float32)                       # (TN, 1)
    fp = fp_ref[...]                                          # (2, C) f32
    freqs = fp[0:1, :]                                        # (1, C)
    phases = fp[1:2, :]                                       # (1, C)

    # Same two f32-rounded ops as the reference -> identical argument.
    # Outer product via VPU broadcast multiply (no MXU for K=1).
    y = x * freqs + phases                                    # (TN, C), radians

    # Range reduction: r = y - 2*pi*k, |r| <~ pi  (k * HI is exact in f32).
    k = jnp.floor(y * _INV_2PI + np.float32(0.5))
    r = (y - k * _TWO_PI_HI) - k * _TWO_PI_MID

    # sqrt(2)*cos(r) = sqrt(2) - 2*sqrt(2)*sin(r/2)^2  with |r/2| <= pi/2.
    h = r * np.float32(0.5)
    w = h * h
    s = h * (np.float32(1.0)
             + w * (_S3 + w * (_S5 + w * (_S7 + w * (_S9 + w * _S11)))))
    out_ref[...] = (_SQRT2 - _TWO_SQRT2 * (s * s)).astype(out_ref.dtype)


def _round_up(v, m):
    return (v + m - 1) // m * m


def _row_quantum(itemsize):
    # Native sublane tiling: (8,128) for 4-byte, (16,128) for 2-byte, ...
    return max(8, 32 // max(1, itemsize))


def _choose_row_tile(n, c, itemsize, *, tn_max=1024, tile_budget_bytes=8 << 20):
    q = _row_quantum(itemsize)
    if n <= q:
        return n                       # single block spanning the full batch dim
    rows_budget = max(q, (tile_budget_bytes // max(1, c * itemsize)) // q * q)
    tn = min(tn_max, rows_budget, _round_up(n, q))
    # Guarantee >= 2 grid steps so ("parallel",) can shard across both v7x
    # TensorCores; negligible cost on single-core v5e/v6e.
    tn = min(tn, _round_up(pl.cdiv(n, 2), q))
    return max(q, (tn // q) * q)


def mp_fourier(x, freqs_phases, *, tn_max=1024, tile_budget_bytes=8 << 20):
    """x: [N]; freqs_phases: [2, C] float32 (row 0 = freqs, row 1 = phases).
    Returns cos(outer(x, freqs) + phases) * sqrt(2) as [N, C] in x.dtype."""
    assert x.ndim == 1
    assert freqs_phases.ndim == 2 and freqs_phases.shape[0] == 2
    assert freqs_phases.dtype == jnp.float32
    n = x.shape[0]
    c = freqs_phases.shape[1]
    itemsize = jnp.dtype(x.dtype).itemsize
    tn = _choose_row_tile(n, c, itemsize,
                          tn_max=tn_max, tile_budget_bytes=tile_budget_bytes)

    return pl.pallas_call(
        _mp_fourier_kernel,
        out_shape=jax.ShapeDtypeStruct((n, c), x.dtype),
        grid=(pl.cdiv(n, tn),),
        in_specs=[
            pl.BlockSpec((tn, 1), lambda i: (i, 0)),   # rows of x
            pl.BlockSpec((2, c), lambda i: (0, 0)),    # resident freqs/phases
        ],
        out_specs=pl.BlockSpec((tn, c), lambda i: (i, 0)),
        compiler_params=pltpu.CompilerParams(
            dimension_semantics=("parallel",),
            vmem_limit_bytes=32 << 20,
        ),
    )(x.reshape(n, 1), freqs_phases)


class MPFourierJAX:
    """Deterministic JAX re-implementation of MPFourier's buffers + forward."""

    def __init__(self, num_channels, bandwidth=1, *, key):
        k_freq, k_phase = jax.random.split(key)
        self.freqs = (2.0 * np.pi) * jax.random.normal(
            k_freq, (num_channels,), dtype=jnp.float32) * bandwidth
        self.phases = (2.0 * np.pi) * jax.random.uniform(
            k_phase, (num_channels,), dtype=jnp.float32)
        # Static buffers hoisted to init: packed (2, C) f32, built exactly once.
        self._freqs_phases = jnp.stack(
            [self.freqs.astype(jnp.float32), self.phases.astype(jnp.float32)],
            axis=0)

    def __call__(self, x):
        return mp_fourier(x, self._freqs_phases)


def _reference(x, freqs, phases):
    # Mirrors the PyTorch forward exactly (f32 compute, cast back to x.dtype).
    y = (x.astype(jnp.float32)[:, None] * freqs[None, :].astype(jnp.float32)
         + phases[None, :].astype(jnp.float32))
    return (jnp.cos(y) * np.sqrt(2.0)).astype(x.dtype)


if __name__ == "__main__":
    key = jax.random.PRNGKey(0)
    k_mod, k_x, k_x2, k_mod2, k_x3 = jax.random.split(key, 5)

    # Small shapes implied by the forward: a batch of scalars -> [N, C].
    num_channels = 32
    batch = 8
    mod = MPFourierJAX(num_channels, bandwidth=1, key=k_mod)
    x = jax.random.normal(k_x, (batch,), dtype=jnp.float32)

    y = jax.block_until_ready(mod(x))
    ref = _reference(x, mod.freqs, mod.phases)
    assert y.shape == (batch, num_channels) and y.dtype == x.dtype
    np.testing.assert_allclose(np.asarray(y), np.asarray(ref),
                               rtol=1e-5, atol=1e-5)

    # Ragged larger N + bf16 input: multi-step grid with a partial final block.
    x_big = jax.random.normal(k_x2, (2000,), dtype=jnp.bfloat16)
    y_big = jax.block_until_ready(mod(x_big))
    ref_big = _reference(x_big, mod.freqs, mod.phases)
    assert y_big.shape == (2000, num_channels) and y_big.dtype == x_big.dtype
    np.testing.assert_allclose(np.asarray(y_big, dtype=np.float32),
                               np.asarray(ref_big, dtype=np.float32),
                               rtol=2e-2, atol=2e-2)

    # Lane-dense channel count (C % 128 == 0), multi-block f32 path.
    mod2 = MPFourierJAX(256, bandwidth=1, key=k_mod2)
    x_mid = jax.random.uniform(k_x3, (300,), dtype=jnp.float32,
                               minval=-2.0, maxval=2.0)
    y_mid = jax.block_until_ready(mod2(x_mid))
    ref_mid = _reference(x_mid, mod2.freqs, mod2.phases)
    assert y_mid.shape == (300, 256) and y_mid.dtype == x_mid.dtype
    np.testing.assert_allclose(np.asarray(y_mid), np.asarray(ref_mid),
                               rtol=1e-5, atol=1e-5)

    print("KERNEL_OK")
</pallas_src>

<mosaic_0001>
module attributes {stable_mosaic.version = 11 : i64} {
  func.func @_mp_fourier_kernel(%arg0: i32, %arg1: memref<8x1xf32, #tpu.memory_space<vmem>>, %arg2: memref<2x32xf32, #tpu.memory_space<vmem>>, %arg3: memref<8x32xf32, #tpu.memory_space<vmem>>) attributes {dimension_semantics = [#tpu.dimension_semantics<parallel>], iteration_bounds = array<i64: 1>, scalar_prefetch = 0 : i64, scratch_operands = 0 : i64, tpu.core_type = #tpu.core_type<tc>, window_params = [{transform_indices = @transform_0, window_bounds = array<i64: 8, 1>}, {pipeline_mode = #tpu.pipeline_mode<synchronous>, transform_indices = @transform_1, window_bounds = array<i64: 2, 32>}, {transform_indices = @transform_2, window_bounds = array<i64: 8, 32>}]} {
    %c0 = arith.constant 0 : index
    %c0_0 = arith.constant 0 : index
    %0 = vector.load %arg1[%c0, %c0_0] : memref<8x1xf32, #tpu.memory_space<vmem>>, vector<8x1xf32>
    %c0_1 = arith.constant 0 : index
    %c0_2 = arith.constant 0 : index
    %1 = vector.load %arg2[%c0_1, %c0_2] : memref<2x32xf32, #tpu.memory_space<vmem>>, vector<2x32xf32>
    %2 = vector.extract_strided_slice %1 {offsets = [0, 0], sizes = [1, 32], strides = [1, 1]} : vector<2x32xf32> to vector<1x32xf32>
    %3 = vector.extract_strided_slice %1 {offsets = [1, 0], sizes = [1, 32], strides = [1, 1]} : vector<2x32xf32> to vector<1x32xf32>
    %4 = vector.broadcast %0 : vector<8x1xf32> to vector<8x32xf32>
    %5 = vector.broadcast %2 : vector<1x32xf32> to vector<8x32xf32>
    %6 = arith.mulf %4, %5 : vector<8x32xf32>
    %7 = vector.broadcast %3 : vector<1x32xf32> to vector<8x32xf32>
    %8 = arith.addf %6, %7 : vector<8x32xf32>
    %cst = arith.constant 0.159154937 : f32
    %9 = vector.broadcast %cst : f32 to vector<8x32xf32>
    %10 = arith.mulf %8, %9 : vector<8x32xf32>
    %cst_3 = arith.constant 5.000000e-01 : f32
    %11 = vector.broadcast %cst_3 : f32 to vector<8x32xf32>
    %12 = arith.addf %10, %11 : vector<8x32xf32>
    %13 = math.floor %12 : vector<8x32xf32>
    %cst_4 = arith.constant 6.281250e+00 : f32
    %14 = vector.broadcast %cst_4 : f32 to vector<8x32xf32>
    %15 = arith.mulf %13, %14 : vector<8x32xf32>
    %16 = arith.subf %8, %15 : vector<8x32xf32>
    %cst_5 = arith.constant 0.00193530717 : f32
    %17 = vector.broadcast %cst_5 : f32 to vector<8x32xf32>
    %18 = arith.mulf %13, %17 : vector<8x32xf32>
    %19 = arith.subf %16, %18 : vector<8x32xf32>
    %cst_6 = arith.constant 5.000000e-01 : f32
    %20 = vector.broadcast %cst_6 : f32 to vector<8x32xf32>
    %21 = arith.mulf %19, %20 : vector<8x32xf32>
    %22 = arith.mulf %21, %21 : vector<8x32xf32>
    %cst_7 = arith.constant -2.50521079E-8 : f32
    %23 = vector.broadcast %cst_7 : f32 to vector<8x32xf32>
    %24 = arith.mulf %22, %23 : vector<8x32xf32>
    %cst_8 = arith.constant 2.75573188E-6 : f32
    %25 = vector.broadcast %cst_8 : f32 to vector<8x32xf32>
    %26 = arith.addf %25, %24 : vector<8x32xf32>
    %27 = arith.mulf %22, %26 : vector<8x32xf32>
    %cst_9 = arith.constant -1.98412701E-4 : f32
    %28 = vector.broadcast %cst_9 : f32 to vector<8x32xf32>
    %29 = arith.addf %28, %27 : vector<8x32xf32>
    %30 = arith.mulf %22, %29 : vector<8x32xf32>
    %cst_10 = arith.constant 0.00833333377 : f32
    %31 = vector.broadcast %cst_10 : f32 to vector<8x32xf32>
    %32 = arith.addf %31, %30 : vector<8x32xf32>
    %33 = arith.mulf %22, %32 : vector<8x32xf32>
    %cst_11 = arith.constant -0.166666672 : f32
    %34 = vector.broadcast %cst_11 : f32 to vector<8x32xf32>
    %35 = arith.addf %34, %33 : vector<8x32xf32>
    %36 = arith.mulf %22, %35 : vector<8x32xf32>
    %cst_12 = arith.constant 1.000000e+00 : f32
    %37 = vector.broadcast %cst_12 : f32 to vector<8x32xf32>
    %38 = arith.addf %37, %36 : vector<8x32xf32>
    %39 = arith.mulf %21, %38 : vector<8x32xf32>
    %40 = arith.mulf %39, %39 : vector<8x32xf32>
    %cst_13 = arith.constant 2.82842708 : f32
    %41 = vector.broadcast %cst_13 : f32 to vector<8x32xf32>
    %42 = arith.mulf %41, %40 : vector<8x32xf32>
    %cst_14 = arith.constant 1.41421354 : f32
    %43 = vector.broadcast %cst_14 : f32 to vector<8x32xf32>
    %44 = arith.subf %43, %42 : vector<8x32xf32>
    %c0_15 = arith.constant 0 : index
    %c0_16 = arith.constant 0 : index
    %45 = vector.load %arg3[%c0_15, %c0_16] : memref<8x32xf32, #tpu.memory_space<vmem>>, vector<8x32xf32>
    tpu.vector_store %arg3[%c0_15, %c0_16], %44 {strides = array<i32>} : memref<8x32xf32, #tpu.memory_space<vmem>>, vector<8x32xf32>,
    return
  }
  func.func @transform_0(%arg0: i32) -> (i32, i32) {
    %c0_i32 = arith.constant 0 : i32
    %c0_i32_0 = arith.constant 0 : i32
    return %arg0, %c0_i32 : i32, i32
  }
  func.func @transform_1(%arg0: i32) -> (i32, i32) {
    %c0_i32 = arith.constant 0 : i32
    %c0_i32_0 = arith.constant 0 : i32
    %c0_i32_1 = arith.constant 0 : i32
    return %c0_i32, %c0_i32_0 : i32, i32
  }
  func.func @transform_2(%arg0: i32) -> (i32, i32) {
    %c0_i32 = arith.constant 0 : i32
    %c0_i32_0 = arith.constant 0 : i32
    return %arg0, %c0_i32 : i32, i32
  }
}

</mosaic_0001>

<llo_original>
// kernel: tpu_custom_call.1
$region0: #{tpu_custom_call.1}
  #allocation0 [shape = 'u32[]', space=smem, size = 0x4, offset = 0x4, fixed_abs, tag = 'smem constant byte address 0x4 - core index']
  #allocation1 [shape = 'u32[144,128]{1,0:T(1,128)}', space=vmem, size = 0x12000, scoped, tag = 'internal scratch']
  %s0 = inlined_call_operand.vmem [shape: f32[8,1], index: 0, kind: input, shape index: {}]
  %s1 = inlined_call_operand.vmem [shape: f32[2,32], index: 1, kind: input, shape index: {}]
  %s2 = inlined_call_operand.hbm [shape: f32[8,32], index: 2, kind: output, shape index: {}]
  %s3 = sld [smem:[#allocation0]]
  $region18: #{tpu_custom_call.1} parent=0
    _
  %s5 = ssub.s32 1, %s3
  %s6 = scalar_select 0, %s5, %s3
  $region1: #{tpu_custom_call.1} parent=0
    #allocation2 [shape = 'u8[4096]{0}', space=vmem, size = 0x1000, scoped, tag = 'output window, operand 0, single buffered']
    #allocation3 [shape = 's32[1]{0}', space=sflag, size = 0x4, scoped, tag = 'scoped memory for tpu_custom_call.1']
    %7 = vsyncpa [#allocation3], 0
    // Predicated region
    $region2: #{tpu_custom_call.1} parent=1 // pred_check
      _
    $region3: #{tpu_custom_call.1} parent=1 // pred_check_branch
      %9 = sbr.rel (0) target = $region5
    $region4: #{tpu_custom_call.1} parent=1 // pred_region
      _
    $region5: #{tpu_custom_call.1} parent=1 // pred_fallthru
      _
    // Predicated region
    $region6: #{tpu_custom_call.1} parent=1 // pred_check
      _
    $region7: #{tpu_custom_call.1} parent=1 // pred_check_branch
      %11 = sbr.rel (0) target = $region9
    $region8: #{tpu_custom_call.1} parent=1 // pred_region
      _
    $region9: #{tpu_custom_call.1} parent=1 // pred_fallthru
      _
    %v12 = vld [vmem:[%s0] sm:$0xff]
    %v13 = vld [vmem:[%s1] sm:$0x3]
    %15 = vset.pattern.permute.xlu0 0
    %16 = vperm.xlu0 %15, %v12
    %v17 = vpop.permute.xlu0 %16
    %v19 = vlaneseq
    %v20 = vshrl.u32 %v19, 7
    %v21 = vsub.s32 0, %v20
    %v22 = vrot.slane %v13, %v21
    %v23 = vmul.f32 %v17, %v22
    %v24 = vlaneseq
    %v25 = vshrl.u32 %v24, 7
    %v26 = vsub.s32 1, %v25
    %v27 = vrot.slane %v13, %v26
    %v28 = vadd.f32 %v23, %v27
    %v29 = vmul.f32 %v28, 0.15915494
    %v30 = vadd.f32 %v29, 0.5
    %v31 = vfloor.f32 %v30
    %v32 = vmul.f32 %v31, 6.28125
    %v33 = vsub.f32 %v28, %v32
    %v34 = vmul.f32 %v31, 0.0019353072
    %v35 = vsub.f32 %v33, %v34
    %v36 = vmul.f32 %v35, 0.5
    %v37 = vmul.f32 %v36, %v36
    %v38 = vmul.f32 %v37, -2.5052108e-08
    %v39 = vadd.f32 %v38, 2.7557319e-06
    %v40 = vmul.f32 %v37, %v39
    %v41 = vadd.f32 %v40, -0.0001984127
    %v42 = vmul.f32 %v37, %v41
    %v43 = vadd.f32 %v42, 0.008333334
    %v44 = vmul.f32 %v37, %v43
    %v45 = vadd.f32 %v44, -0.16666667
    %v46 = vmul.f32 %v37, %v45
    %v47 = vadd.f32 %v46, 1.0
    %v48 = vmul.f32 %v36, %v47
    %v49 = vmul.f32 %v48, %v48
    %v50 = vmul.f32 %v49, 2.828427
    %v51 = vsub.f32 1.4142135, %v50
    %vm52 = vcmask 261120
    %53 = vst.msk [vmem:[#allocation2] sm:$0xff] %vm52, %v51
    // Predicated region
    $region10: #{tpu_custom_call.1} parent=1 // pred_check
      _
    $region11: #{tpu_custom_call.1} parent=1 // pred_check_branch
      %55 = sbr.rel (0) target = $region13
    $region12: #{tpu_custom_call.1} parent=1 // pred_region
      %s57 = ssub.s32 128, 128
      %58 = vsyncadd [#allocation3], %s57
      %s60 = sshll.u32 [#allocation2], 4
      %s61 = int_to_ptr.vmem [resolvable:$true] %s60
      %63 = dma.vmem_to_hbm [thread:$0]  %s61, 128, %s2, [#allocation3]
    $region13: #{tpu_custom_call.1} parent=1 // pred_fallthru
      _
    // Predicated region
    $region14: #{tpu_custom_call.1} parent=1 // pred_check
      _
    $region15: #{tpu_custom_call.1} parent=1 // pred_check_branch
      %65 = sbr.rel (0) target = $region17
    $region16: #{tpu_custom_call.1} parent=1 // pred_region
      %66 = dma.done [#allocation3], 128
    $region17: #{tpu_custom_call.1} parent=1 // pred_fallthru
      _
    %67 = vsyncpa [#allocation3], 1

</llo_original>
